<compile_context>
chip_gen: v7x
topology: tpu7x:2x2x1
jax: 0.10.0
libtpu: 0.0.40
codegen_flags: <defaults>
</compile_context>

<pallas_src>
import functools

import jax
import jax.numpy as jnp
from jax.experimental import pallas as pl
from jax.experimental.pallas import tpu as pltpu


def _conv1x1_bn_kernel(x_ref, w_ref, s_ref, b_ref, o_ref, xb_ref):
    # x_ref : (C_in, tm)  activation tile, pixels on lanes (input dtype, e.g. f32)
    # w_ref : (tn, C_in)  raw conv weight, bf16
    # s_ref : (tn, 1)     BN scale, f32 (broadcast along lanes)
    # b_ref : (tn, 1)     BN bias,  f32
    # o_ref : (tn, tm)    output tile (lane-dense)
    # xb_ref: (C_in, tm)  bf16 scratch holding the casted activation tile
    @pl.when(pl.program_id(2) == 0)   # new X tile only on the first C_out step
    def _():
        xb_ref[...] = x_ref[...].astype(jnp.bfloat16)

    acc = jnp.dot(w_ref[...], xb_ref[...], preferred_element_type=jnp.float32)
    o_ref[...] = (acc * s_ref[...] + b_ref[...]).astype(o_ref.dtype)


def _tpu_generation_params(c_out):
    """(block_budget_bytes, vmem_limit_bytes, tn) tuned per TPU generation."""
    kind = ""
    try:
        kind = jax.devices()[0].device_kind.lower()
    except Exception:
        pass

    vmem_cap = None
    try:
        vmem_cap = int(pltpu.get_tpu_info().vmem_capacity_bytes)
    except Exception:
        vmem_cap = None
    if vmem_cap is None:
        # Conservative fallback: assume the smallest per-core VMEM (64 MiB).
        vmem_cap = 64 * 1024 * 1024
        if ("v5" in kind) or ("v6" in kind):
            vmem_cap = 128 * 1024 * 1024

    if vmem_cap >= 100 * 1024 * 1024:          # v5e / v6e class (128 MiB VMEM)
        budget, limit = 80 * 1024 * 1024, 96 * 1024 * 1024
    else:                                      # v7x class (64 MiB physical VMEM)
        budget, limit = 36 * 1024 * 1024, 48 * 1024 * 1024

    # v5e: 4x128x128 MXU + single vector-store slot -> prefer 128-wide C_out tiles.
    is_v5e = ("v5 lite" in kind) or ("v5e" in kind) or ("v5lite" in kind)
    tn_cap = 128 if is_v5e else 256
    tn = c_out if c_out <= tn_cap else tn_cap
    return budget, limit, tn


def _pick_tile_m(m, c_in, tn, x_bytes, out_bytes, budget_bytes):
    """Largest lane-tile whose full block footprint fits the VMEM budget."""
    per_col = 2 * x_bytes * c_in          # activation block, double-buffered
    per_col += 2 * c_in                   # bf16 activation scratch (single buffer)
    per_col += 2 * out_bytes * tn         # output block, double-buffered
    fixed = 2 * 2 * tn * c_in             # bf16 weight block, double-buffered
    fixed += 4 * 4 * tn                   # f32 scale + bias blocks, double-buffered
    avail = max(budget_bytes - fixed, 0)
    tm = avail // max(per_col, 1)
    tm = max(128, min(2048, tm))
    tm = (tm // 128) * 128                # last block dim: multiple of 128 ...
    if m <= tm:
        return m                          # ... or equal to the full axis
    return tm                             # trailing partial block is masked


@functools.partial(jax.jit, static_argnames=("stride", "eps"))
def conv1x1_linear(x, conv_w, bn_gamma, bn_beta, bn_mean, bn_var, *,
                   stride=1, eps=1e-5):
    """x: (N, C_in, H, W) NCHW. conv_w: (C_out, C_in, 1, 1).

    Returns (N, C_out, H_out, W_out) matching PyTorch
    BatchNorm2d(eval)(Conv2d(1x1, bias=False, stride)(x)).
    """
    n, c_in, h, w = x.shape
    c_out = conv_w.shape[0]

    # 1x1 conv with stride s == spatial subsampling.
    # TODO(synk): fold the stride-s subsampling into the activation DMA; a plain
    # BlockSpec can only express it at one-output-row-per-step granularity
    # (destroying lane density), so a manual strided-DMA gather would be needed.
    if stride != 1:
        x = x[:, :, ::stride, ::stride]
    h_out, w_out = x.shape[2], x.shape[3]
    m = h_out * w_out

    # Eval-mode BN folded to per-channel (scale, bias), applied in f32 in the
    # kernel epilogue (kept OUT of the bf16 weight to avoid precision blow-up).
    scale = bn_gamma.astype(jnp.float32) / jnp.sqrt(bn_var.astype(jnp.float32) + eps)
    bias = bn_beta.astype(jnp.float32) - bn_mean.astype(jnp.float32) * scale
    wm = conv_w.reshape(c_out, c_in).astype(jnp.bfloat16)     # MXU-native weight
    scale = scale.reshape(c_out, 1)
    bias = bias.reshape(c_out, 1)

    # Small-feature-map path: collapse batch onto the lane axis (tensor is tiny
    # here, so the two transposes are cheap) to keep stores lane-dense and the
    # MXU N dim large.
    collapse = (n > 1) and (m < 512)
    if collapse:
        xr = x.reshape(n, c_in, m).transpose(1, 0, 2).reshape(1, c_in, n * m)
        nb, big_m = 1, n * m
    else:
        xr = x.reshape(n, c_in, m)        # free reshape only, pixels on lanes
        nb, big_m = n, m

    budget, vmem_limit, tn = _tpu_generation_params(c_out)
    x_bytes = max(int(x.dtype.itemsize), 2)
    out_bytes = int(x.dtype.itemsize)
    tm = _pick_tile_m(big_m, c_in, tn, x_bytes, out_bytes, budget)
    grid = (nb, pl.cdiv(big_m, tm), pl.cdiv(c_out, tn))
    # TODO(synk): for very large C_in add a reduction grid axis over C_in with an
    # f32 accumulator scratch (pl.when init/finalize, axis marked "arbitrary").

    out = pl.pallas_call(
        _conv1x1_bn_kernel,
        out_shape=jax.ShapeDtypeStruct((nb, c_out, big_m), x.dtype),
        grid_spec=pltpu.PrefetchScalarGridSpec(
            num_scalar_prefetch=0,
            grid=grid,
            in_specs=[
                # activation: constant over the inner C_out axis -> DMA'd once,
                # stays VMEM-resident while the small blocks below stream.
                pl.BlockSpec((None, c_in, tm), lambda b, i, j: (b, 0, i)),
                pl.BlockSpec((tn, c_in), lambda b, i, j: (j, 0)),   # weight
                pl.BlockSpec((tn, 1), lambda b, i, j: (j, 0)),      # BN scale
                pl.BlockSpec((tn, 1), lambda b, i, j: (j, 0)),      # BN bias
            ],
            out_specs=pl.BlockSpec((None, tn, tm), lambda b, i, j: (b, j, i)),
            scratch_shapes=[pltpu.VMEM((c_in, tm), jnp.bfloat16)],  # casted X tile
        ),
        compiler_params=pltpu.CompilerParams(
            # outer axes independent (megacore can split them); inner C_out axis
            # kept "arbitrary" so the j==0 scratch initializer is always visited.
            dimension_semantics=("parallel", "parallel", "arbitrary"),
            vmem_limit_bytes=vmem_limit,
        ),
    )(xr, wm, scale, bias)

    if collapse:
        out = out.reshape(c_out, n, m).transpose(1, 0, 2)
    return out.reshape(n, c_out, h_out, w_out)


def _reference(x, conv_w, gamma, beta, mean, var, stride=1, eps=1e-5):
    # pure-JAX f32 reference: 1x1 conv via einsum + eval-mode BN
    if stride != 1:
        x = x[:, :, ::stride, ::stride]
    y = jnp.einsum("nchw,oc->nohw", x,
                   conv_w.reshape(conv_w.shape[0], conv_w.shape[1]))
    s = gamma / jnp.sqrt(var + eps)
    return y * s[None, :, None, None] + (beta - mean * s)[None, :, None, None]


if __name__ == "__main__":
    key = jax.random.PRNGKey(0)
    k_x, k_w, k_g, k_b, k_m, k_v = jax.random.split(key, 6)

    N, C_IN, C_OUT, H, W = 2, 4, 8, 16, 16

    x = jax.random.normal(k_x, (N, C_IN, H, W), dtype=jnp.float32)
    conv_w = jax.random.normal(k_w, (C_OUT, C_IN, 1, 1), dtype=jnp.float32) * 0.1
    bn_gamma = 1.0 + 0.1 * jax.random.normal(k_g, (C_OUT,), dtype=jnp.float32)
    bn_beta = 0.1 * jax.random.normal(k_b, (C_OUT,), dtype=jnp.float32)
    bn_mean = 0.05 * jax.random.normal(k_m, (C_OUT,), dtype=jnp.float32)
    bn_var = jnp.abs(jax.random.normal(k_v, (C_OUT,), dtype=jnp.float32)) + 0.5

    # stride=1 exercises the normal path; stride=2 exercises the small-m
    # batch-collapse path.
    for stride in (1, 2):
        out = conv1x1_linear(x, conv_w, bn_gamma, bn_beta, bn_mean, bn_var,
                             stride=stride)
        out = jax.block_until_ready(out)
        ref = _reference(x, conv_w, bn_gamma, bn_beta, bn_mean, bn_var,
                         stride=stride)
        assert out.shape == ref.shape, (out.shape, ref.shape)
        # bf16 MXU inputs (f32 accumulation, f32 BN epilogue) vs. f32 reference.
        assert jnp.allclose(out, ref, atol=2e-2, rtol=2e-2), \
            float(jnp.max(jnp.abs(out - ref)))

    print("KERNEL_OK")
</pallas_src>

<mosaic_0001>
module attributes {stable_mosaic.version = 11 : i64} {
  func.func @_conv1x1_bn_kernel(%arg0: i32, %arg1: i32, %arg2: i32, %arg3: memref<1x4x512xf32, #tpu.memory_space<vmem>>, %arg4: memref<8x4xbf16, #tpu.memory_space<vmem>>, %arg5: memref<8x1xf32, #tpu.memory_space<vmem>>, %arg6: memref<8x1xf32, #tpu.memory_space<vmem>>, %arg7: memref<1x8x512xf32, #tpu.memory_space<vmem>>, %arg8: memref<4x512xbf16, #tpu.memory_space<vmem>>) attributes {dimension_semantics = [#tpu.dimension_semantics<parallel>, #tpu.dimension_semantics<parallel>, #tpu.dimension_semantics<arbitrary>], iteration_bounds = array<i64: 1, 1, 1>, scalar_prefetch = 0 : i64, scratch_operands = 1 : i64, tpu.core_type = #tpu.core_type<tc>, window_params = [{transform_indices = @transform_0, window_bounds = array<i64: 1, 4, 512>}, {transform_indices = @transform_1, window_bounds = array<i64: 8, 4>}, {transform_indices = @transform_2, window_bounds = array<i64: 8, 1>}, {transform_indices = @transform_3, window_bounds = array<i64: 8, 1>}, {transform_indices = @transform_4, window_bounds = array<i64: 1, 8, 512>}]} {
    %c0_i32 = arith.constant 0 : i32
    %0 = arith.cmpi eq, %arg2, %c0_i32 : i32
    %1 = arith.extui %0 : i1 to i32
    %c0_i32_0 = arith.constant 0 : i32
    %2 = arith.cmpi ne, %1, %c0_i32_0 : i32
    scf.if %2 {
      %c0_11 = arith.constant 0 : index
      %c0_12 = arith.constant 0 : index
      %c0_13 = arith.constant 0 : index
      %15 = vector.load %arg3[%c0_11, %c0_12, %c0_13] : memref<1x4x512xf32, #tpu.memory_space<vmem>>, vector<1x4x512xf32>
      %16 = vector.shape_cast %15 : vector<1x4x512xf32> to vector<4x512xf32>
      %17 = arith.truncf %16 : vector<4x512xf32> to vector<4x512xbf16>
      %c0_14 = arith.constant 0 : index
      %c0_15 = arith.constant 0 : index
      %18 = vector.load %arg8[%c0_14, %c0_15] : memref<4x512xbf16, #tpu.memory_space<vmem>>, vector<4x512xbf16>
      tpu.vector_store %arg8[%c0_14, %c0_15], %17 {strides = array<i32>} : memref<4x512xbf16, #tpu.memory_space<vmem>>, vector<4x512xbf16>,
    } else {
    }
    %c0 = arith.constant 0 : index
    %c0_1 = arith.constant 0 : index
    %3 = vector.load %arg4[%c0, %c0_1] : memref<8x4xbf16, #tpu.memory_space<vmem>>, vector<8x4xbf16>
    %c0_2 = arith.constant 0 : index
    %c0_3 = arith.constant 0 : index
    %4 = vector.load %arg8[%c0_2, %c0_3] : memref<4x512xbf16, #tpu.memory_space<vmem>>, vector<4x512xbf16>
    %cst = arith.constant dense<0.000000e+00> : vector<8x512xf32>
    %5 = tpu.matmul %3, %4, %cst {dimension_numbers = #tpu.dot_dimension_numbers<[1], [0], [0], [1], [0, 0, 1, 1], [], []>} : vector<8x4xbf16>, vector<4x512xbf16>, vector<8x512xf32> -> vector<8x512xf32>
    %c0_4 = arith.constant 0 : index
    %c0_5 = arith.constant 0 : index
    %6 = vector.load %arg5[%c0_4, %c0_5] : memref<8x1xf32, #tpu.memory_space<vmem>>, vector<8x1xf32>
    %7 = vector.broadcast %6 : vector<8x1xf32> to vector<8x512xf32>
    %8 = arith.mulf %5, %7 : vector<8x512xf32>
    %c0_6 = arith.constant 0 : index
    %c0_7 = arith.constant 0 : index
    %9 = vector.load %arg6[%c0_6, %c0_7] : memref<8x1xf32, #tpu.memory_space<vmem>>, vector<8x1xf32>
    %10 = vector.broadcast %9 : vector<8x1xf32> to vector<8x512xf32>
    %11 = arith.addf %8, %10 : vector<8x512xf32>
    %c0_8 = arith.constant 0 : index
    %c0_9 = arith.constant 0 : index
    %c0_10 = arith.constant 0 : index
    %12 = vector.load %arg7[%c0_8, %c0_9, %c0_10] : memref<1x8x512xf32, #tpu.memory_space<vmem>>, vector<1x8x512xf32>
    %13 = vector.shape_cast %12 : vector<1x8x512xf32> to vector<8x512xf32>
    %14 = vector.shape_cast %11 : vector<8x512xf32> to vector<1x8x512xf32>
    tpu.vector_store %arg7[%c0_8, %c0_9, %c0_10], %14 {strides = array<i32>} : memref<1x8x512xf32, #tpu.memory_space<vmem>>, vector<1x8x512xf32>,
    return
  }
  func.func @transform_0(%arg0: i32, %arg1: i32, %arg2: i32) -> (i32, i32, i32) {
    %c0_i32 = arith.constant 0 : i32
    %c0_i32_0 = arith.constant 0 : i32
    return %arg0, %c0_i32, %arg1 : i32, i32, i32
  }
  func.func @transform_1(%arg0: i32, %arg1: i32, %arg2: i32) -> (i32, i32) {
    %c0_i32 = arith.constant 0 : i32
    %c0_i32_0 = arith.constant 0 : i32
    return %arg2, %c0_i32 : i32, i32
  }
  func.func @transform_2(%arg0: i32, %arg1: i32, %arg2: i32) -> (i32, i32) {
    %c0_i32 = arith.constant 0 : i32
    %c0_i32_0 = arith.constant 0 : i32
    return %arg2, %c0_i32 : i32, i32
  }
  func.func @transform_3(%arg0: i32, %arg1: i32, %arg2: i32) -> (i32, i32) {
    %c0_i32 = arith.constant 0 : i32
    %c0_i32_0 = arith.constant 0 : i32
    return %arg2, %c0_i32 : i32, i32
  }
  func.func @transform_4(%arg0: i32, %arg1: i32, %arg2: i32) -> (i32, i32, i32) {
    %c0_i32 = arith.constant 0 : i32
    return %arg0, %arg2, %arg1 : i32, i32, i32
  }
}

</mosaic_0001>

<llo_original>
// kernel: conv1x1_linear.1
$region0: #{conv1x1_linear.1}
  #allocation0 [shape = 'u32[]', space=smem, size = 0x4, offset = 0x4, fixed_abs, tag = 'smem constant byte address 0x4 - core index']
  #allocation1 [shape = 'u32[144,128]{1,0:T(1,128)}', space=vmem, size = 0x12000, scoped, tag = 'internal scratch']
  #allocation2 [shape = 'bf16[4,512]{1,0:T(4,128)(2,1)}', space=vmem, size = 0x1000, scoped, tag = 'scratch operand']
  %s0 = inlined_call_operand.vmem [shape: f32[1,4,512], index: 0, kind: input, shape index: {}]
  %s1 = inlined_call_operand.vmem [shape: bf16[8,4], index: 1, kind: input, shape index: {}]
  %s2 = inlined_call_operand.vmem [shape: f32[8,1], index: 2, kind: input, shape index: {}]
  %s3 = inlined_call_operand.vmem [shape: f32[8,1], index: 3, kind: input, shape index: {}]
  %s4 = inlined_call_operand.vmem [shape: f32[1,8,512], index: 4, kind: output, shape index: {}]
  %s5 = sld [smem:[#allocation0]]
  $region30: #{conv1x1_linear.1} parent=0
    _
  %s7 = ssub.s32 1, %s5
  %s8 = scalar_select 0, %s7, %s5
  // Predicated region
  $region2: #{conv1x1_linear.1} parent=0 // pred_check
    _
  $region3: #{conv1x1_linear.1} parent=0 // pred_check_branch
    %10 = sbr.rel (0) target = $region5
  $region4: #{conv1x1_linear.1} parent=0 // pred_region
    _
  $region5: #{conv1x1_linear.1} parent=0 // pred_fallthru
    _
  // Predicated region
  $region6: #{conv1x1_linear.1} parent=0 // pred_check
    _
  $region7: #{conv1x1_linear.1} parent=0 // pred_check_branch
    %12 = sbr.rel (0) target = $region9
  $region8: #{conv1x1_linear.1} parent=0 // pred_region
    _
  $region9: #{conv1x1_linear.1} parent=0 // pred_fallthru
    _
  // Predicated region
  $region10: #{conv1x1_linear.1} parent=0 // pred_check
    _
  $region11: #{conv1x1_linear.1} parent=0 // pred_check_branch
    %14 = sbr.rel (0) target = $region13
  $region12: #{conv1x1_linear.1} parent=0 // pred_region
    _
  $region13: #{conv1x1_linear.1} parent=0 // pred_fallthru
    _
  // Predicated region
  $region14: #{conv1x1_linear.1} parent=0 // pred_check
    _
  $region15: #{conv1x1_linear.1} parent=0 // pred_check_branch
    %16 = sbr.rel (0) target = $region17
  $region16: #{conv1x1_linear.1} parent=0 // pred_region
    _
  $region17: #{conv1x1_linear.1} parent=0 // pred_fallthru
    _
  %p18 = scmp.eq.s32.totalorder 0, 0
  // Predicated region
  $region18: #{conv1x1_linear.1} parent=0 // pred_check
    %p19 = pneg %p18
  $region19: #{conv1x1_linear.1} parent=0 // pred_check_branch
    %21 = sbr.rel (%p19) target = $region21
  $region20: #{conv1x1_linear.1} parent=0 // pred_region
    %v22 = vld [vmem:[%s0] sm:$0xff]
    %v23 = vld [vmem:[%s0 + $0x8] sm:$0xff]
    %v26 = vcombine.high %v22, %v22
    %v27 = vcombine.high %v23, %v23
    %v30 = vpack.c.bf16 %v22, %v22
    %v31 = vpack.c.bf16 %v26, %v26
    %v32 = vpack.c.bf16 %v23, %v23
    %v33 = vpack.c.bf16 %v27, %v27
    %v38 = vcombine.low %v30, %v31
    %v39 = vcombine.low %v32, %v33
    %v41 = vunpack.c.l.s4 1983009808
    %v42 = vunpack.c.0.s8 %v41
    %v43 = vlaneseq
    %v44 = vshrl.u32 %v43, 7
    %v45 = vsub.s32 %v42, %v44
    %v46 = vrot.slane %v38, %v45
    %v48 = vunpack.c.l.s4 1983009808
    %v49 = vunpack.c.0.s8 %v48
    %v50 = vlaneseq
    %v51 = vshrl.u32 %v50, 7
    %v52 = vsub.s32 %v49, %v51
    %v53 = vrot.slane %v39, %v52
    %v54 = vcombine.low %v46, %v53
    %56 = vst [vmem:[#allocation2] sm:$0xff] %v54
  $region21: #{conv1x1_linear.1} parent=0 // pred_fallthru
    _
  %v57 = vld [vmem:[%s1] sm:$0xf]
  %v58 = vld [vmem:[#allocation2] sm:$0xff]
  %v60 = vcombine.high %v58, %v58
  %v62 = vunpack.c.l.s4 1983009808
  %v63 = vunpack.c.0.s8 %v62
  %v64 = vlaneseq
  %v65 = vshrl.u32 %v64, 7
  %v66 = vsub.s32 %v63, %v65
  %v67 = vrot.slane %v58, %v66
  %v69 = vunpack.c.l.s4 1983009808
  %v70 = vunpack.c.0.s8 %v69
  %v71 = vlaneseq
  %v72 = vshrl.u32 %v71, 7
  %v73 = vsub.s32 %v70, %v72
  %v74 = vrot.slane %v60, %v73
  %v75 = vcombine.high %v67, %v67
  %v76 = vcombine.high %v74, %v74
  %vm77 = vcmask 31744
  %v79 = vsel %vm77, %v57, 0
  %vm81 = vcmask 1041408
  %v83 = vsel %vm81, %v67, 0
  %v86 = vsel %vm81, %v75, 0
  %v89 = vsel %vm81, %v74, 0
  %v92 = vsel %vm81, %v76, 0
  %94 = vmatprep.subr.bf16.mxu0 %v86
  %95 = vmatpush1.bf16.msra.mxu0 %v83
  %96 = vmatprep.subr.bf16.mxu0 0
  %97 = vmatpush1.bf16.msra.mxu0 0
  %98 = vmatprep.subr.bf16.mxu0 0
  %99 = vmatpush1.bf16.msra.mxu0 0
  %100 = vmatprep.subr.bf16.mxu0 0
  %101 = vmatpush1.bf16.msra.mxu0 0
  %102 = vmatprep.subr.bf16.mxu0 0
  %103 = vmatpush1.bf16.msra.mxu0 0
  %104 = vmatprep.subr.bf16.mxu0 0
  %105 = vmatpush1.bf16.msra.mxu0 0
  %106 = vmatprep.subr.bf16.mxu0 0
  %107 = vmatpush1.bf16.msra.mxu0 0
  %108 = vmatprep.subr.bf16.mxu0 0
  %109 = vmatpush1.bf16.msra.mxu0 0
  %110 = vmatprep.subr.bf16.mxu0 0
  %111 = vmatpush1.bf16.msra.mxu0 0
  %112 = vmatprep.subr.bf16.mxu0 0
  %113 = vmatpush1.bf16.msra.mxu0 0
  %114 = vmatprep.subr.bf16.mxu0 0
  %115 = vmatpush1.bf16.msra.mxu0 0
  %116 = vmatprep.subr.bf16.mxu0 0
  %117 = vmatpush1.bf16.msra.mxu0 0
  %118 = vmatprep.subr.bf16.mxu0 0
  %119 = vmatpush1.bf16.msra.mxu0 0
  %120 = vmatprep.subr.bf16.mxu0 0
  %121 = vmatpush1.bf16.msra.mxu0 0
  %122 = vmatprep.subr.bf16.mxu0 0
  %123 = vmatpush1.bf16.msra.mxu0 0
  %124 = vmatprep.subr.bf16.mxu0 0
  %125 = vmatpush1.bf16.msra.mxu0 0
  %126 = vmatprep.mubr.bf16.mxu0 0
  %127 = vmatmul.mubr.bf16.gmra.mrb[0].mxu0 %v79
  %v128 = vpop.f32.mrb[0].mxu0
  %v129 = vadd.f32 0.0, %v128
  %v130 = vpop.f32.mrb[0].mxu0
  %v131 = vadd.f32 0.0, %v130
  %v132 = vpop.f32.mrb[0].mxu0
  %v133 = vpop.f32.mrb[0].mxu0
  %134 = vdwg.mxu0
  %135 = vmatprep.subr.bf16.mxu0 %v92
  %136 = vmatpush1.bf16.msra.mxu0 %v89
  %137 = vmatprep.subr.bf16.mxu0 0
  %138 = vmatpush1.bf16.msra.mxu0 0
  %139 = vmatprep.subr.bf16.mxu0 0
  %140 = vmatpush1.bf16.msra.mxu0 0
  %141 = vmatprep.subr.bf16.mxu0 0
  %142 = vmatpush1.bf16.msra.mxu0 0
  %143 = vmatprep.subr.bf16.mxu0 0
  %144 = vmatpush1.bf16.msra.mxu0 0
  %145 = vmatprep.subr.bf16.mxu0 0
  %146 = vmatpush1.bf16.msra.mxu0 0
  %147 = vmatprep.subr.bf16.mxu0 0
  %148 = vmatpush1.bf16.msra.mxu0 0
  %149 = vmatprep.subr.bf16.mxu0 0
  %150 = vmatpush1.bf16.msra.mxu0 0
  %151 = vmatprep.subr.bf16.mxu0 0
  %152 = vmatpush1.bf16.msra.mxu0 0
  %153 = vmatprep.subr.bf16.mxu0 0
  %154 = vmatpush1.bf16.msra.mxu0 0
  %155 = vmatprep.subr.bf16.mxu0 0
  %156 = vmatpush1.bf16.msra.mxu0 0
  %157 = vmatprep.subr.bf16.mxu0 0
  %158 = vmatpush1.bf16.msra.mxu0 0
  %159 = vmatprep.subr.bf16.mxu0 0
  %160 = vmatpush1.bf16.msra.mxu0 0
  %161 = vmatprep.subr.bf16.mxu0 0
  %162 = vmatpush1.bf16.msra.mxu0 0
  %163 = vmatprep.subr.bf16.mxu0 0
  %164 = vmatpush1.bf16.msra.mxu0 0
  %165 = vmatprep.subr.bf16.mxu0 0
  %166 = vmatpush1.bf16.msra.mxu0 0
  %167 = vmatprep.mubr.bf16.mxu0 0
  %168 = vmatmul.mubr.bf16.gmra.mrb[0].mxu0 %v79
  %v169 = vpop.f32.mrb[0].mxu0
  %v170 = vadd.f32 0.0, %v169
  %v171 = vpop.f32.mrb[0].mxu0
  %v172 = vadd.f32 0.0, %v171
  %v173 = vpop.f32.mrb[0].mxu0
  %v174 = vpop.f32.mrb[0].mxu0
  %175 = vdwg.mxu0
  %v176 = vld [vmem:[%s2] sm:$0xff]
  %178 = vset.pattern.permute.xlu0 0
  %179 = vperm.xlu0 %178, %v176
  %v180 = vpop.permute.xlu0 %179
  %v182 = vmul.f32 %v129, %v180
  %v183 = vmul.f32 %v131, %v180
  %v184 = vmul.f32 %v170, %v180
  %v185 = vmul.f32 %v172, %v180
  %v186 = vld [vmem:[%s3] sm:$0xff]
  %188 = vset.pattern.permute.xlu0 0
  %189 = vperm.xlu0 %188, %v186
  %v190 = vpop.permute.xlu0 %189
  %v192 = vadd.f32 %v182, %v190
  %v193 = vadd.f32 %v183, %v190
  %v194 = vadd.f32 %v184, %v190
  %v195 = vadd.f32 %v185, %v190
  %196 = vst [vmem:[%s4] sm:$0xff] %v192
  %197 = vst [vmem:[%s4 + $0x8] sm:$0xff] %v193
  %198 = vst [vmem:[%s4 + $0x10] sm:$0xff] %v194
  %199 = vst [vmem:[%s4 + $0x18] sm:$0xff] %v195
  // Predicated region
  $region22: #{conv1x1_linear.1} parent=0 // pred_check
    _
  $region23: #{conv1x1_linear.1} parent=0 // pred_check_branch
    %201 = sbr.rel (0) target = $region25
  $region24: #{conv1x1_linear.1} parent=0 // pred_region
    _
  $region25: #{conv1x1_linear.1} parent=0 // pred_fallthru
    _
  // Predicated region
  $region26: #{conv1x1_linear.1} parent=0 // pred_check
    _
  $region27: #{conv1x1_linear.1} parent=0 // pred_check_branch
    %203 = sbr.rel (0) target = $region29
  $region28: #{conv1x1_linear.1} parent=0 // pred_region
    _
  $region29: #{conv1x1_linear.1} parent=0 // pred_fallthru
    _

</llo_original>
